<compile_context>
chip_gen: v6e
topology: v6e:2x2x1
jax: 0.10.0
libtpu: 0.0.40
codegen_flags: <defaults>
</compile_context>

<pallas_src>
import math
from functools import partial

import jax
import jax.numpy as jnp
from jax.experimental import pallas as pl
from jax.experimental.pallas import tpu as pltpu

EPS = 1e-5  # nn.BatchNorm2d default eps


def _round_up(x, m):
    return (x + m - 1) // m * m


# ---------------------------------------------------------------------------
# Phase 1: conv matmul + global sum / sum-of-squares accumulation.
# ---------------------------------------------------------------------------
def _conv_stats_kernel(p_ref, w_ref, conv_ref, stats_ref):
    # p_ref    : (TM, K_pad)   im2col patch tile
    # w_ref    : (K_pad, E_pad) flattened conv weight (resident, same block every step)
    # conv_ref : (TM, E_pad)   conv output tile (bias omitted; cancels under BN)
    # stats_ref: (2, E_pad)    row 0 = sum, row 1 = sum of squares (global accumulator)
    conv = jnp.dot(p_ref[...], w_ref[...], preferred_element_type=jnp.float32)
    conv_ref[...] = conv.astype(conv_ref.dtype)

    @pl.when(pl.program_id(0) == 0)
    def _():
        stats_ref[...] = jnp.zeros_like(stats_ref)

    stats_ref[0:1, :] += jnp.sum(conv, axis=0, keepdims=True)
    stats_ref[1:2, :] += jnp.sum(conv * conv, axis=0, keepdims=True)


# ---------------------------------------------------------------------------
# Phase 2: normalize with folded BN affine: out = conv * scale + shift.
# ---------------------------------------------------------------------------
def _normalize_kernel(conv_ref, scale_ref, shift_ref, o_ref):
    o_ref[...] = (conv_ref[...] * scale_ref[...] + shift_ref[...]).astype(o_ref.dtype)


def _im2col(x, kh, kw, stride, pad_h, pad_w):
    """x: (N, C, H, W) -> (N*H_out*W_out, C*kh*kw), plus (H_out, W_out)."""
    n, c, h, w = x.shape
    h_out = (h + 2 * pad_h - kh) // stride + 1
    w_out = (w + 2 * pad_w - kw) // stride + 1
    xp = jnp.pad(x, ((0, 0), (0, 0), (pad_h, pad_h), (pad_w, pad_w)))
    cols = []
    for i in range(kh):
        for j in range(kw):
            cols.append(xp[:, :, i:i + stride * h_out:stride, j:j + stride * w_out:stride])
    # (N, C, kh*kw, H_out, W_out): C slowest, then kh, kw -> matches weight.reshape(E, C*kh*kw)
    col = jnp.stack(cols, axis=2).reshape(n, c * kh * kw, h_out * w_out)
    col = col.transpose(0, 2, 1).reshape(n * h_out * w_out, c * kh * kw)
    return col, h_out, w_out


def overlap_patch_embed(x, conv_w, conv_b, bn_gamma, bn_beta, *, stride=4,
                        tm_max=512, compute_dtype=jnp.float32):
    """Equivalent of OverlapPatchEmbed.forward. Returns (out (N, L, E), H, W).

    conv_b is accepted for API parity but is mathematically redundant: the conv bias
    cancels exactly through the training-mode BatchNorm mean subtraction.
    compute_dtype=jnp.bfloat16 halves HBM traffic for the matmul inputs on v6e/v7x
    (BN math stays in f32 either way); default f32 for bit-tight verification.
    """
    del conv_b  # cancels under BatchNorm (training mode)

    n = x.shape[0]
    e, c, kh, kw = conv_w.shape
    pad_h, pad_w = kh // 2, kw // 2

    patches, h_out, w_out = _im2col(x, kh, kw, stride, pad_h, pad_w)      # (M, K)
    m, k = patches.shape

    # Lane/sublane friendly padding: K, E -> multiples of 128; M -> multiple of TM.
    k_pad = _round_up(k, 128)
    e_pad = _round_up(e, 128)
    tm = min(tm_max, _round_up(m, 16))       # multiple of 16 (bf16-safe sublane tiling)
    m_pad = _round_up(m, tm)
    grid_m = m_pad // tm

    # Zero-padding is exact: padded rows/cols contribute 0 to the matmul and 0 to the
    # BN sums (bias is omitted), so dividing by the true M keeps the stats correct.
    patches_p = jnp.pad(patches, ((0, m_pad - m), (0, k_pad - k))).astype(compute_dtype)
    w_mat = jnp.pad(conv_w.reshape(e, k).T, ((0, k_pad - k), (0, e_pad - e))).astype(compute_dtype)

    cparams_acc = pltpu.CompilerParams(
        dimension_semantics=("arbitrary",),           # stats accumulate across M tiles
        vmem_limit_bytes=32 * 1024 * 1024)
    cparams_par = pltpu.CompilerParams(
        dimension_semantics=("parallel",),            # fully independent tiles
        vmem_limit_bytes=32 * 1024 * 1024)

    # ---- Phase 1: tiled conv matmul + global sum / sumsq --------------------
    conv, stats = pl.pallas_call(
        _conv_stats_kernel,
        out_shape=(jax.ShapeDtypeStruct((m_pad, e_pad), jnp.float32),
                   jax.ShapeDtypeStruct((2, e_pad), jnp.float32)),
        grid_spec=pltpu.PrefetchScalarGridSpec(
            num_scalar_prefetch=0,
            grid=(grid_m,),
            in_specs=[pl.BlockSpec((tm, k_pad), lambda i: (i, 0)),
                      pl.BlockSpec((k_pad, e_pad), lambda i: (0, 0))],
            out_specs=[pl.BlockSpec((tm, e_pad), lambda i: (i, 0)),
                       pl.BlockSpec((2, e_pad), lambda i: (0, 0))],
        ),
        compiler_params=cparams_acc,
    )(patches_p, w_mat)

    # ---- Fold BN (training-mode batch stats) into a single scale/shift ------
    g_pad = jnp.pad(bn_gamma.astype(jnp.float32), (0, e_pad - e))
    b_pad = jnp.pad(bn_beta.astype(jnp.float32), (0, e_pad - e))
    m_true = jnp.float32(m)
    mean = stats[0] / m_true
    var = jnp.maximum(stats[1] / m_true - mean * mean, 0.0)  # biased var (PyTorch semantics)
    inv = jax.lax.rsqrt(var + EPS)
    scale = (g_pad * inv).reshape(1, e_pad)
    shift = (b_pad - mean * g_pad * inv).reshape(1, e_pad)

    # ---- Phase 2: tiled FMA normalize ---------------------------------------
    out = pl.pallas_call(
        _normalize_kernel,
        out_shape=jax.ShapeDtypeStruct((m_pad, e_pad), x.dtype),
        grid_spec=pltpu.PrefetchScalarGridSpec(
            num_scalar_prefetch=0,
            grid=(grid_m,),
            in_specs=[pl.BlockSpec((tm, e_pad), lambda i: (i, 0)),
                      pl.BlockSpec((1, e_pad), lambda i: (0, 0)),
                      pl.BlockSpec((1, e_pad), lambda i: (0, 0))],
            out_specs=pl.BlockSpec((tm, e_pad), lambda i: (i, 0)),
        ),
        compiler_params=cparams_par,
    )(conv, scale, shift)

    # Strip padding; (N*H*W, E) -> (N, H*W, E) == x.flatten(2).transpose(1, 2)
    out = out[:m, :e].reshape(n, h_out * w_out, e)
    return out, h_out, w_out


def _reference(x, conv_w, conv_b, bn_gamma, bn_beta, *, stride=4):
    """Pure-JAX reference for verification."""
    kh, kw = conv_w.shape[2], conv_w.shape[3]
    y = jax.lax.conv_general_dilated(
        x, conv_w, window_strides=(stride, stride),
        padding=((kh // 2, kh // 2), (kw // 2, kw // 2)),
        dimension_numbers=("NCHW", "OIHW", "NCHW"),
    ) + conv_b[None, :, None, None]
    mean = jnp.mean(y, axis=(0, 2, 3), keepdims=True)
    var = jnp.mean((y - mean) ** 2, axis=(0, 2, 3), keepdims=True)
    y = (y - mean) * jax.lax.rsqrt(var + EPS)
    y = y * bn_gamma[None, :, None, None] + bn_beta[None, :, None, None]
    n, e, h, w = y.shape
    return y.reshape(n, e, h * w).transpose(0, 2, 1), h, w


if __name__ == "__main__":
    # Small shapes consistent with the module: img_size=16, patch_size=7, stride=4,
    # in_chans=4, embed_dim=32, batch=2.
    N, C, H, W = 2, 4, 16, 16
    E, KH, KW, STRIDE = 32, 7, 7, 4

    key = jax.random.PRNGKey(0)
    kx, kw_ = jax.random.split(key)

    x = jax.random.normal(kx, (N, C, H, W), dtype=jnp.float32)

    # Conv2d init per _init_weights: normal(0, sqrt(2 / (kh*kw*out_ch))), bias = 0.
    fan_out = KH * KW * E
    conv_w = jax.random.normal(kw_, (E, C, KH, KW), dtype=jnp.float32) * math.sqrt(2.0 / fan_out)
    conv_b = jnp.zeros((E,), dtype=jnp.float32)
    # BatchNorm2d fresh init: weight = 1, bias = 0.
    bn_gamma = jnp.ones((E,), dtype=jnp.float32)
    bn_beta = jnp.zeros((E,), dtype=jnp.float32)

    out, h_out, w_out = overlap_patch_embed(x, conv_w, conv_b, bn_gamma, bn_beta, stride=STRIDE)
    out = jax.block_until_ready(out)

    ref, h_ref, w_ref = _reference(x, conv_w, conv_b, bn_gamma, bn_beta, stride=STRIDE)
    assert (h_out, w_out) == (h_ref, w_ref) == (4, 4)
    assert out.shape == (N, h_out * w_out, E)
    assert jnp.allclose(out, ref, atol=1e-4, rtol=1e-4)

    print("KERNEL_OK")
</pallas_src>

<mosaic_0001>
module attributes {stable_mosaic.version = 11 : i64} {
  func.func @_conv_stats_kernel(%arg0: i32, %arg1: memref<32x256xf32, #tpu.memory_space<vmem>>, %arg2: memref<256x128xf32, #tpu.memory_space<vmem>>, %arg3: memref<32x128xf32, #tpu.memory_space<vmem>>, %arg4: memref<2x128xf32, #tpu.memory_space<vmem>>) attributes {dimension_semantics = [#tpu.dimension_semantics<arbitrary>], iteration_bounds = array<i64: 1>, scalar_prefetch = 0 : i64, scratch_operands = 0 : i64, tpu.core_type = #tpu.core_type<tc>, window_params = [{transform_indices = @transform_0, window_bounds = array<i64: 32, 256>}, {pipeline_mode = #tpu.pipeline_mode<synchronous>, transform_indices = @transform_1, window_bounds = array<i64: 256, 128>}, {transform_indices = @transform_2, window_bounds = array<i64: 32, 128>}, {pipeline_mode = #tpu.pipeline_mode<synchronous>, transform_indices = @transform_3, window_bounds = array<i64: 2, 128>}]} {
    %c0 = arith.constant 0 : index
    %c0_0 = arith.constant 0 : index
    %0 = vector.load %arg1[%c0, %c0_0] : memref<32x256xf32, #tpu.memory_space<vmem>>, vector<32x256xf32>
    %c0_1 = arith.constant 0 : index
    %c0_2 = arith.constant 0 : index
    %1 = vector.load %arg2[%c0_1, %c0_2] : memref<256x128xf32, #tpu.memory_space<vmem>>, vector<256x128xf32>
    %cst = arith.constant dense<0.000000e+00> : vector<32x128xf32>
    %2 = tpu.matmul %0, %1, %cst {dimension_numbers = #tpu.dot_dimension_numbers<[1], [0], [0], [1], [0, 0, 1, 1], [], []>} : vector<32x256xf32>, vector<256x128xf32>, vector<32x128xf32> -> vector<32x128xf32>
    %c0_3 = arith.constant 0 : index
    %c0_4 = arith.constant 0 : index
    %3 = vector.load %arg3[%c0_3, %c0_4] : memref<32x128xf32, #tpu.memory_space<vmem>>, vector<32x128xf32>
    tpu.vector_store %arg3[%c0_3, %c0_4], %2 {strides = array<i32>} : memref<32x128xf32, #tpu.memory_space<vmem>>, vector<32x128xf32>,
    %c0_i32 = arith.constant 0 : i32
    %4 = arith.cmpi eq, %arg0, %c0_i32 : i32
    %5 = arith.extui %4 : i1 to i32
    %c0_i32_5 = arith.constant 0 : i32
    %6 = arith.cmpi ne, %5, %c0_i32_5 : i32
    scf.if %6 {
      %cst_15 = arith.constant 0.000000e+00 : f32
      %18 = vector.broadcast %cst_15 : f32 to vector<2x128xf32>
      %c0_16 = arith.constant 0 : index
      %c0_17 = arith.constant 0 : index
      %19 = vector.load %arg4[%c0_16, %c0_17] : memref<2x128xf32, #tpu.memory_space<vmem>>, vector<2x128xf32>
      tpu.vector_store %arg4[%c0_16, %c0_17], %18 {strides = array<i32>} : memref<2x128xf32, #tpu.memory_space<vmem>>, vector<2x128xf32>,
    } else {
    }
    %c0_6 = arith.constant 0 : index
    %c0_7 = arith.constant 0 : index
    %7 = vector.load %arg4[%c0_6, %c0_7] : memref<2x128xf32, #tpu.memory_space<vmem>>, vector<1x128xf32>
    %cst_8 = arith.constant dense<0.000000e+00> : vector<128xf32>
    %8 = vector.multi_reduction <add>, %2, %cst_8 [0] : vector<32x128xf32> to vector<128xf32>
    %9 = vector.shape_cast %8 : vector<128xf32> to vector<1x128xf32>
    %10 = arith.addf %7, %9 : vector<1x128xf32>
    %c0_9 = arith.constant 0 : index
    %c0_10 = arith.constant 0 : index
    %11 = vector.load %arg4[%c0_9, %c0_10] : memref<2x128xf32, #tpu.memory_space<vmem>>, vector<1x128xf32>
    tpu.vector_store %arg4[%c0_9, %c0_10], %10 {strides = array<i32>} : memref<2x128xf32, #tpu.memory_space<vmem>>, vector<1x128xf32>,
    %c1 = arith.constant 1 : index
    %c0_11 = arith.constant 0 : index
    %12 = vector.load %arg4[%c1, %c0_11] : memref<2x128xf32, #tpu.memory_space<vmem>>, vector<1x128xf32>
    %13 = arith.mulf %2, %2 : vector<32x128xf32>
    %cst_12 = arith.constant dense<0.000000e+00> : vector<128xf32>
    %14 = vector.multi_reduction <add>, %13, %cst_12 [0] : vector<32x128xf32> to vector<128xf32>
    %15 = vector.shape_cast %14 : vector<128xf32> to vector<1x128xf32>
    %16 = arith.addf %12, %15 : vector<1x128xf32>
    %c1_13 = arith.constant 1 : index
    %c0_14 = arith.constant 0 : index
    %17 = vector.load %arg4[%c1_13, %c0_14] : memref<2x128xf32, #tpu.memory_space<vmem>>, vector<1x128xf32>
    tpu.vector_store %arg4[%c1_13, %c0_14], %16 {strides = array<i32>} : memref<2x128xf32, #tpu.memory_space<vmem>>, vector<1x128xf32>,
    return
  }
  func.func @transform_0(%arg0: i32) -> (i32, i32) {
    %c0_i32 = arith.constant 0 : i32
    %c0_i32_0 = arith.constant 0 : i32
    return %arg0, %c0_i32 : i32, i32
  }
  func.func @transform_1(%arg0: i32) -> (i32, i32) {
    %c0_i32 = arith.constant 0 : i32
    %c0_i32_0 = arith.constant 0 : i32
    %c0_i32_1 = arith.constant 0 : i32
    return %c0_i32, %c0_i32_0 : i32, i32
  }
  func.func @transform_2(%arg0: i32) -> (i32, i32) {
    %c0_i32 = arith.constant 0 : i32
    %c0_i32_0 = arith.constant 0 : i32
    return %arg0, %c0_i32 : i32, i32
  }
  func.func @transform_3(%arg0: i32) -> (i32, i32) {
    %c0_i32 = arith.constant 0 : i32
    %c0_i32_0 = arith.constant 0 : i32
    %c0_i32_1 = arith.constant 0 : i32
    return %c0_i32, %c0_i32_0 : i32, i32
  }
}

</mosaic_0001>

<llo_original>
// kernel: tpu_custom_call.1
$region0: #{tpu_custom_call.1}
  #allocation0 [shape = 'u32[]', space=smem, size = 0x4, offset = 0x4, fixed_abs, tag = 'smem constant byte address 0x4 - core index']
  #allocation1 [shape = 'u32[144,128]{1,0:T(1,128)}', space=vmem, size = 0x12000, scoped, tag = 'internal scratch']
  %s0 = inlined_call_operand.hbm [shape: f32[32,256], index: 0, kind: input, shape index: {}]
  %s1 = inlined_call_operand.hbm [shape: f32[256,128], index: 1, kind: input, shape index: {}]
  %s2 = inlined_call_operand.hbm [shape: f32[32,128], index: 2, kind: output, shape index: {0}]
  %s3 = inlined_call_operand.hbm [shape: f32[2,128], index: 3, kind: output, shape index: {1}]
  %4 = xla_tuple %s2, %s3
  %s5 = sld [smem:[#allocation0]]
  $region38: #{tpu_custom_call.1} parent=0
    _
  %s7 = ssub.s32 1, %s5
  %s8 = scalar_select 0, %s7, %s5
  $region1: #{tpu_custom_call.1} parent=0
    #allocation2 [shape = 'u8[32768]{0}', space=vmem, size = 0x8000, scoped, tag = 'input window, operand 0, single buffered']
    #allocation3 [shape = 's32[1]{0}', space=sflag, size = 0x4, scoped, tag = 'scoped memory for tpu_custom_call.1']
    #allocation4 [shape = 's32[1]{0}', space=sflag, size = 0x4, scoped, tag = 'scoped memory for tpu_custom_call.1']
    #allocation5 [shape = 'u8[131072]{0}', space=vmem, size = 0x20000, scoped, tag = 'input window, operand 1, single buffered']
    #allocation6 [shape = 's32[1]{0}', space=sflag, size = 0x4, scoped, tag = 'scoped memory for tpu_custom_call.1']
    #allocation7 [shape = 'u8[16384]{0}', space=vmem, size = 0x4000, scoped, tag = 'output window, operand 0, single buffered']
    #allocation8 [shape = 'u8[1024]{0}', space=vmem, size = 0x400, scoped, tag = 'output window, operand 1, single buffered']
    #allocation9 [shape = 's32[1]{0}', space=sflag, size = 0x4, scoped, tag = 'scoped memory for tpu_custom_call.1']
    %9 = vsyncpa [#allocation3], 0
    %10 = vsyncpa [#allocation6], 0
    %11 = vsyncpa [#allocation4], 0
    %12 = vsyncpa [#allocation9], 0
    // Predicated region
    $region2: #{tpu_custom_call.1} parent=1 // pred_check
      _
    $region3: #{tpu_custom_call.1} parent=1 // pred_check_branch
      %14 = sbr.rel (0) target = $region5
    $region4: #{tpu_custom_call.1} parent=1 // pred_region
      %s16 = ssub.s32 1024, 1024
      %17 = vsyncadd [#allocation3], %s16
      %s18 = sshll.u32 [#allocation2], 4
      %s19 = int_to_ptr.vmem [resolvable:$true] %s18
      %24 = dma.hbm_to_vmem [thread:$0]  %s0, 1024, %s19, [#allocation3], 256, 256, 16
    $region5: #{tpu_custom_call.1} parent=1 // pred_fallthru
      _
    // Predicated region
    $region6: #{tpu_custom_call.1} parent=1 // pred_check
      _
    $region7: #{tpu_custom_call.1} parent=1 // pred_check_branch
      %26 = sbr.rel (0) target = $region9
    $region8: #{tpu_custom_call.1} parent=1 // pred_region
      %s28 = ssub.s32 4096, 4096
      %29 = vsyncadd [#allocation6], %s28
      %s30 = sshll.u32 [#allocation5], 4
      %s31 = int_to_ptr.vmem [resolvable:$true] %s30
      %36 = dma.hbm_to_vmem [thread:$0]  %s1, 4096, %s31, [#allocation6], 128, 128, 8
    $region9: #{tpu_custom_call.1} parent=1 // pred_fallthru
      _
    // Predicated region
    $region10: #{tpu_custom_call.1} parent=1 // pred_check
      _
    $region11: #{tpu_custom_call.1} parent=1 // pred_check_branch
      %38 = sbr.rel (0) target = $region13
    $region12: #{tpu_custom_call.1} parent=1 // pred_region
      %39 = dma.done [#allocation3], 1024
    $region13: #{tpu_custom_call.1} parent=1 // pred_fallthru
      _
    // Predicated region
    $region14: #{tpu_custom_call.1} parent=1 // pred_check
      _
    $region15: #{tpu_custom_call.1} parent=1 // pred_check_branch
      %41 = sbr.rel (0) target = $region17
    $region16: #{tpu_custom_call.1} parent=1 // pred_region
      %42 = dma.done [#allocation6], 4096
    $region17: #{tpu_custom_call.1} parent=1 // pred_fallthru
      _
    %v43 = vld [vmem:[#allocation2] sm:$0xff]
    %v44 = vld [vmem:[#allocation2 + $0x8] sm:$0xff]
    %v45 = vld [vmem:[#allocation2 + $0x10] sm:$0xff]
    %v46 = vld [vmem:[#allocation2 + $0x18] sm:$0xff]
    %v47 = vld [vmem:[#allocation2 + $0x20] sm:$0xff]
    %v48 = vld [vmem:[#allocation2 + $0x28] sm:$0xff]
    %v49 = vld [vmem:[#allocation2 + $0x30] sm:$0xff]
    %v50 = vld [vmem:[#allocation2 + $0x38] sm:$0xff]
    %v51 = vld [vmem:[#allocation5] sm:$0xff]
    %v52 = vld [vmem:[#allocation5 + $0x8] sm:$0xff]
    %v53 = vld [vmem:[#allocation5 + $0x10] sm:$0xff]
    %v54 = vld [vmem:[#allocation5 + $0x18] sm:$0xff]
    %v55 = vld [vmem:[#allocation5 + $0x20] sm:$0xff]
    %v56 = vld [vmem:[#allocation5 + $0x28] sm:$0xff]
    %v57 = vld [vmem:[#allocation5 + $0x30] sm:$0xff]
    %v58 = vld [vmem:[#allocation5 + $0x38] sm:$0xff]
    %v59 = vld [vmem:[#allocation5 + $0x40] sm:$0xff]
    %v60 = vld [vmem:[#allocation5 + $0x48] sm:$0xff]
    %v61 = vld [vmem:[#allocation5 + $0x50] sm:$0xff]
    %v62 = vld [vmem:[#allocation5 + $0x58] sm:$0xff]
    %v63 = vld [vmem:[#allocation5 + $0x60] sm:$0xff]
    %v64 = vld [vmem:[#allocation5 + $0x68] sm:$0xff]
    %v65 = vld [vmem:[#allocation5 + $0x70] sm:$0xff]
    %v66 = vld [vmem:[#allocation5 + $0x78] sm:$0xff]
    %v67 = vld [vmem:[#allocation5 + $0x80] sm:$0xff]
    %v68 = vld [vmem:[#allocation5 + $0x88] sm:$0xff]
    %v69 = vld [vmem:[#allocation5 + $0x90] sm:$0xff]
    %v70 = vld [vmem:[#allocation5 + $0x98] sm:$0xff]
    %v71 = vld [vmem:[#allocation5 + $0xa0] sm:$0xff]
    %v72 = vld [vmem:[#allocation5 + $0xa8] sm:$0xff]
    %v73 = vld [vmem:[#allocation5 + $0xb0] sm:$0xff]
    %v74 = vld [vmem:[#allocation5 + $0xb8] sm:$0xff]
    %v75 = vld [vmem:[#allocation5 + $0xc0] sm:$0xff]
    %v76 = vld [vmem:[#allocation5 + $0xc8] sm:$0xff]
    %v77 = vld [vmem:[#allocation5 + $0xd0] sm:$0xff]
    %v78 = vld [vmem:[#allocation5 + $0xd8] sm:$0xff]
    %v79 = vld [vmem:[#allocation5 + $0xe0] sm:$0xff]
    %v80 = vld [vmem:[#allocation5 + $0xe8] sm:$0xff]
    %v81 = vld [vmem:[#allocation5 + $0xf0] sm:$0xff]
    %v82 = vld [vmem:[#allocation5 + $0xf8] sm:$0xff]
    %83 = vmatprep.subr.mxu0 0.0
    %84 = vmatpush1.msra.mxu0 %v66
    %85 = vmatprep.subr.mxu0 0.0
    %86 = vmatpush1.msra.mxu0 %v65
    %87 = vmatprep.subr.mxu0 0.0
    %88 = vmatpush1.msra.mxu0 %v64
    %89 = vmatprep.subr.mxu0 0.0
    %90 = vmatpush1.msra.mxu0 %v63
    %91 = vmatprep.subr.mxu0 0.0
    %92 = vmatpush1.msra.mxu0 %v62
    %93 = vmatprep.subr.mxu0 0.0
    %94 = vmatpush1.msra.mxu0 %v61
    %95 = vmatprep.subr.mxu0 0.0
    %96 = vmatpush1.msra.mxu0 %v60
    %97 = vmatprep.subr.mxu0 0.0
    %98 = vmatpush1.msra.mxu0 %v59
    %99 = vmatprep.subr.mxu0 0.0
    %100 = vmatpush1.msra.mxu0 %v58
    %101 = vmatprep.subr.mxu0 0.0
    %102 = vmatpush1.msra.mxu0 %v57
    %103 = vmatprep.subr.mxu0 0.0
    %104 = vmatpush1.msra.mxu0 %v56
    %105 = vmatprep.subr.mxu0 0.0
    %106 = vmatpush1.msra.mxu0 %v55
    %107 = vmatprep.subr.mxu0 0.0
    %108 = vmatpush1.msra.mxu0 %v54
    %109 = vmatprep.subr.mxu0 0.0
    %110 = vmatpush1.msra.mxu0 %v53
    %111 = vmatprep.subr.mxu0 0.0
    %112 = vmatpush1.msra.mxu0 %v52
    %113 = vmatprep.subr.mxu0 0.0
    %114 = vmatpush1.msra.mxu0 %v51
    %115 = vmatprep.subr.mxu0 0.0
    %116 = vmatpush2.msra.mxu0 %v82
    %117 = vmatprep.subr.mxu0 0.0
    %118 = vmatpush2.msra.mxu0 %v81
    %119 = vmatprep.subr.mxu0 0.0
    %120 = vmatpush2.msra.mxu0 %v80
    %121 = vmatprep.subr.mxu0 0.0
    %122 = vmatpush2.msra.mxu0 %v79
    %123 = vmatprep.subr.mxu0 0.0
    %124 = vmatpush2.msra.mxu0 %v78
    %125 = vmatprep.subr.mxu0 0.0
    %126 = vmatpush2.msra.mxu0 %v77
    %127 = vmatprep.subr.mxu0 0.0
    %128 = vmatpush2.msra.mxu0 %v76
    %129 = vmatprep.subr.mxu0 0.0
    %130 = vmatpush2.msra.mxu0 %v75
    %131 = vmatprep.subr.mxu0 0.0
    %132 = vmatpush2.msra.mxu0 %v74
    %133 = vmatprep.subr.mxu0 0.0
    %134 = vmatpush2.msra.mxu0 %v73
    %135 = vmatprep.subr.mxu0 0.0
    %136 = vmatpush2.msra.mxu0 %v72
    %137 = vmatprep.subr.mxu0 0.0
    %138 = vmatpush2.msra.mxu0 %v71
    %139 = vmatprep.subr.mxu0 0.0
    %140 = vmatpush2.msra.mxu0 %v70
    %141 = vmatprep.subr.mxu0 0.0
    %142 = vmatpush2.msra.mxu0 %v69
    %143 = vmatprep.subr.mxu0 0.0
    %144 = vmatpush2.msra.mxu0 %v68
    %145 = vmatprep.subr.mxu0 0.0
    %146 = vmatpush2.msra.mxu0 %v67
    %147 = vmatprep.mubr.f32.mxu0 %v44
    %148 = vmatmul.mubr.f32.gmra.mxu0 %v43
    %v149 = vpop.f32.mrf.mxu0
    %v150 = vadd.f32 0.0, %v149
    %v151 = vpop.f32.mrf.mxu0
    %152 = vmatprep.mubr.f32.mxu0 %v46
    %153 = vmatmul.mubr.f32.gmra.mxu0 %v45
    %v154 = vpop.f32.mrf.mxu0
    %v155 = vadd.f32 0.0, %v154
    %v156 = vpop.f32.mrf.mxu0
    %157 = vmatprep.mubr.f32.mxu0 %v48
    %158 = vmatmul.mubr.f32.gmra.mxu0 %v47
    %v159 = vpop.f32.mrf.mxu0
    %v160 = vadd.f32 0.0, %v159
    %v161 = vpop.f32.mrf.mxu0
    %162 = vmatprep.mubr.f32.mxu0 %v50
    %163 = vmatmul.mubr.f32.gmra.mxu0 %v49
    %v164 = vpop.f32.mrf.mxu0
    %v165 = vadd.f32 0.0, %v164
    %v166 = vpop.f32.mrf.mxu0
    %167 = vdwg.mxu0
    %168 = vst [vmem:[#allocation7] sm:$0xff] %v150
    %169 = vst [vmem:[#allocation7 + $0x8] sm:$0xff] %v155
    %170 = vst [vmem:[#allocation7 + $0x10] sm:$0xff] %v160
    %171 = vst [vmem:[#allocation7 + $0x18] sm:$0xff] %v165
    %p172 = scmp.eq.s32.totalorder 0, 0
    // Predicated region
    $region18: #{tpu_custom_call.1} parent=1 // pred_check
      %p173 = pneg %p172
    $region19: #{tpu_custom_call.1} parent=1 // pred_check_branch
      %175 = sbr.rel (%p173) target = $region21
    $region20: #{tpu_custom_call.1} parent=1 // pred_region
      %176 = vst [vmem:[#allocation8] sm:$0x3] 0.0
    $region21: #{tpu_custom_call.1} parent=1 // pred_fallthru
      _
    %v177 = vld [vmem:[#allocation8] sm:$0x1]
    %v178 = vadd.f32 %v150, %v155
    %v179 = vadd.f32 %v178, %v160
    %v180 = vadd.f32 %v179, %v165
    %v181 = vrot.slane %v180, 4
    %v182 = vadd.f32 %v180, %v181
    %v183 = vrot.slane %v182, 2
    %v184 = vadd.f32 %v182, %v183
    %v185 = vrot.slane %v184, 1
    %v186 = vadd.f32 %v184, %v185
    %v187 = vadd.f32 %v177, %v186
    %188 = vst [vmem:[#allocation8] sm:$0x1] %v187
    %v189 = vld [vmem:[#allocation8 + $0x1] sm:$0x1]
    %v190 = vmul.f32 %v150, %v150
    %v191 = vmul.f32 %v155, %v155
    %v192 = vmul.f32 %v160, %v160
    %v193 = vmul.f32 %v165, %v165
    %v194 = vadd.f32 %v190, %v191
    %v195 = vadd.f32 %v194, %v192
    %v196 = vadd.f32 %v195, %v193
    %v197 = vrot.slane %v196, 4
    %v198 = vadd.f32 %v196, %v197
    %v199 = vrot.slane %v198, 2
    %v200 = vadd.f32 %v198, %v199
    %v201 = vrot.slane %v200, 1
    %v202 = vadd.f32 %v200, %v201
    %v203 = vadd.f32 %v189, %v202
    %204 = vst [vmem:[#allocation8 + $0x1] sm:$0x1] %v203
    // Predicated region
    $region22: #{tpu_custom_call.1} parent=1 // pred_check
      _
    $region23: #{tpu_custom_call.1} parent=1 // pred_check_branch
      %206 = sbr.rel (0) target = $region25
    $region24: #{tpu_custom_call.1} parent=1 // pred_region
      %s208 = ssub.s32 512, 512
      %209 = vsyncadd [#allocation4], %s208
      %s210 = sshll.u32 [#allocation7], 4
      %s211 = int_to_ptr.vmem [resolvable:$true] %s210
      %216 = dma.vmem_to_hbm [thread:$0]  %s211, 512, %s2, [#allocation4], 128, 128, 8
    $region25: #{tpu_custom_call.1} parent=1 // pred_fallthru
      _
    // Predicated region
    $region26: #{tpu_custom_call.1} parent=1 // pred_check
      _
    $region27: #{tpu_custom_call.1} parent=1 // pred_check_branch
      %218 = sbr.rel (0) target = $region29
    $region28: #{tpu_custom_call.1} parent=1 // pred_region
      %s220 = ssub.s32 32, 32
      %221 = vsyncadd [#allocation9], %s220
      %s223 = sshll.u32 [#allocation8], 4
      %s224 = int_to_ptr.vmem [resolvable:$true] %s223
      %226 = dma.vmem_to_hbm [thread:$0]  %s224, 32, %s3, [#allocation9]
    $region29: #{tpu_custom_call.1} parent=1 // pred_fallthru
      _
    // Predicated region
    $region30: #{tpu_custom_call.1} parent=1 // pred_check
      _
    $region31: #{tpu_custom_call.1} parent=1 // pred_check_branch
      %228 = sbr.rel (0) target = $region33
    $region32: #{tpu_custom_call.1} parent=1 // pred_region
      %229 = dma.done [#allocation4], 512
    $region33: #{tpu_custom_call.1} parent=1 // pred_fallthru
      _
    // Predicated region
    $region34: #{tpu_custom_call.1} parent=1 // pred_check
      _
    $region35: #{tpu_custom_call.1} parent=1 // pred_check_branch
      %231 = sbr.rel (0) target = $region37
    $region36: #{tpu_custom_call.1} parent=1 // pred_region
      %232 = dma.done [#allocation9], 32
    $region37: #{tpu_custom_call.1} parent=1 // pred_fallthru
      _
    %233 = vsyncpa [#allocation3], 1
    %234 = vsyncpa [#allocation6], 1
    %235 = vsyncpa [#allocation4], 1
    %236 = vsyncpa [#allocation9], 1

</llo_original>
